<compile_context>
chip_gen: v7x
topology: tpu7x:2x2x1
jax: 0.10.0
libtpu: 0.0.40
codegen_flags: <defaults>
</compile_context>

<pallas_src>
import functools
import math

import jax
import jax.numpy as jnp
from jax.experimental import pallas as pl
from jax.experimental.pallas import tpu as pltpu


# ----------------------------------------------------------------------------
# Fused kernel: whole processor in one invocation, static unroll over layers.
# ----------------------------------------------------------------------------
def _gnn_fused_kernel(feats_ref,   # (N, F)        VMEM
                      wsrc_ref,    # (F, 128*L)    VMEM  source-half attn W, all layers
                      wtgt_ref,    # (L, F, 128)   VMEM  target-half attn W per layer
                      ab1_ref,     # (1, 128*L)    VMEM  attn b1, all layers
                      aw2_ref,     # (L, 128)      VMEM  attn second-layer W (row form)
                      ab2_ref,     # (L,)          SMEM  attn second-layer bias scalars
                      guwt_ref,    # (L, F, 2F)    VMEM  [gate_w | upd_w1] target half
                      guwa_ref,    # (L, F, 2F)    VMEM  [gate_w | upd_w1] aggregated half
                      gub_ref,     # (L, 2F)       VMEM  [gate_b | upd_b1]
                      uw2_ref,     # (L, F, F)     VMEM  upd second-layer W
                      ub2_ref,     # (L, F)        VMEM  upd second-layer bias
                      out_ref,     # (N, F)        VMEM
                      *, num_layers):
    feats = feats_ref[...]                                   # (N, F) fp32
    N, F = feats.shape

    # Path-row mask (row 0 is the target); built once, outside the layer loop.
    row = jax.lax.broadcasted_iota(jnp.int32, (N, 1), 0)
    path_mask = (row >= 1).astype(feats.dtype)               # (N, 1)

    # Layer-invariant hoist: path rows never change, so compute the source-side
    # attention matmul for every layer in one MXU op.  Row 0 of this is stale
    # after layer 0 but is masked out of the attention anyway.
    h_src_all = jnp.dot(feats, wsrc_ref[...],
                        preferred_element_type=jnp.float32)  # (N, 128*L)

    target = feats[0:1, :]                                   # (1, F) evolving target row

    for l in range(num_layers):                              # static unroll (L small)
        lo = l * 128

        # ---- attention MLP: split target/source halves, no lane concat -----
        t_term = (jnp.dot(target, wtgt_ref[l],
                          preferred_element_type=jnp.float32)
                  + ab1_ref[0:1, lo:lo + 128])                # (1, 128)
        h = jnp.maximum(h_src_all[:, lo:lo + 128] + t_term, 0.0)  # (N, 128)

        # 128 -> 1 projection as VPU mul + cross-lane reduce.
        logits = jnp.sum(h * aw2_ref[l:l + 1, :], axis=-1,
                         keepdims=True) + ab2_ref[l]          # (N, 1)
        attn = jax.nn.sigmoid(logits) * path_mask             # row 0 zeroed

        s = jnp.sum(attn)
        attn = jnp.where(s > 0.0, attn * (1.0 / s), attn)

        # ---- weighted aggregation of path states (row 0 contributes 0) -----
        agg = jnp.sum(feats * attn, axis=0, keepdims=True)    # (1, F)

        # ---- fused gate + update first layer, split over the two halves ----
        pre = (jnp.dot(target, guwt_ref[l], preferred_element_type=jnp.float32)
               + jnp.dot(agg, guwa_ref[l], preferred_element_type=jnp.float32)
               + gub_ref[l:l + 1, :])                          # (1, 2F)
        gate = jax.nn.sigmoid(pre[:, :F])                      # (1, F)
        upd_h = jnp.maximum(pre[:, F:], 0.0)                   # (1, F)

        update = (jnp.dot(upd_h, uw2_ref[l],
                          preferred_element_type=jnp.float32)
                  + ub2_ref[l:l + 1, :])                       # (1, F)

        target = target + gate * update                        # carry to next layer

    # Single writeback: path rows unchanged, row 0 gets the final target.
    out_ref[...] = feats
    out_ref[0:1, :] = target


# ----------------------------------------------------------------------------
# Parameter packing: kernel-preferred layouts (halves split, layers stacked).
# ----------------------------------------------------------------------------
def _pack_params(layer_params):
    F = layer_params[0]["gate_w"].shape[1]
    wsrc = jnp.concatenate([p["attn_w1"][F:, :] for p in layer_params], axis=1)  # (F, 128L)
    wtgt = jnp.stack([p["attn_w1"][:F, :] for p in layer_params])                # (L, F, 128)
    ab1 = jnp.concatenate([p["attn_b1"] for p in layer_params], axis=1)          # (1, 128L)
    aw2 = jnp.stack([p["attn_w2"].reshape(-1) for p in layer_params])            # (L, 128)
    ab2 = jnp.stack([p["attn_b2"].reshape(()) for p in layer_params])            # (L,)
    guwt = jnp.stack([jnp.concatenate([p["gate_w"][:F], p["upd_w1"][:F]], axis=1)
                      for p in layer_params])                                    # (L, F, 2F)
    guwa = jnp.stack([jnp.concatenate([p["gate_w"][F:], p["upd_w1"][F:]], axis=1)
                      for p in layer_params])                                    # (L, F, 2F)
    gub = jnp.stack([jnp.concatenate([p["gate_b"], p["upd_b1"]], axis=1).reshape(-1)
                     for p in layer_params])                                     # (L, 2F)
    uw2 = jnp.stack([p["upd_w2"] for p in layer_params])                         # (L, F, F)
    ub2 = jnp.stack([p["upd_b2"].reshape(-1) for p in layer_params])             # (L, F)
    return wsrc, wtgt, ab1, aw2, ab2, guwt, guwa, gub, uw2, ub2


def gnn_processor(features, layer_params):
    """GNNProcessor forward: all layers fused into one grid-less pallas_call."""
    N, F = features.shape
    L = len(layer_params)
    if N <= 1 or L == 0:        # static-shape equivalent of the PyTorch early return
        return features

    packed = _pack_params(layer_params)

    vmem = pl.BlockSpec(memory_space=pltpu.MemorySpace.VMEM)
    smem = pl.BlockSpec(memory_space=pltpu.MemorySpace.SMEM)
    in_specs = [vmem,                      # features
                vmem, vmem, vmem, vmem,    # wsrc, wtgt, ab1, aw2
                smem,                      # ab2 scalars
                vmem, vmem, vmem,          # guwt, guwa, gub
                vmem, vmem]                # uw2, ub2

    return pl.pallas_call(
        functools.partial(_gnn_fused_kernel, num_layers=L),
        out_shape=jax.ShapeDtypeStruct((N, F), features.dtype),
        in_specs=in_specs,
        out_specs=vmem,
    )(features, *packed)


# ----------------------------------------------------------------------------
# Deterministic parameter init (PyTorch-style uniform(-1/sqrt(fan_in), ...)).
# Weights stored as (in, out) == PyTorch weight.T ; biases as (1, out).
# ----------------------------------------------------------------------------
def _linear_params(key, fan_in, fan_out):
    kw, kb = jax.random.split(key)
    bound = 1.0 / math.sqrt(fan_in)
    w = jax.random.uniform(kw, (fan_in, fan_out), jnp.float32, -bound, bound)
    b = jax.random.uniform(kb, (1, fan_out), jnp.float32, -bound, bound)
    return w, b


def init_gnn_layer_params(key, feature_dim):
    ks = jax.random.split(key, 5)
    attn_w1, attn_b1 = _linear_params(ks[0], 2 * feature_dim, 128)
    attn_w2, attn_b2 = _linear_params(ks[1], 128, 1)
    upd_w1, upd_b1 = _linear_params(ks[2], 2 * feature_dim, feature_dim)
    upd_w2, upd_b2 = _linear_params(ks[3], feature_dim, feature_dim)
    gate_w, gate_b = _linear_params(ks[4], 2 * feature_dim, feature_dim)
    return dict(attn_w1=attn_w1, attn_b1=attn_b1,
                attn_w2=attn_w2, attn_b2=attn_b2,
                upd_w1=upd_w1, upd_b1=upd_b1,
                upd_w2=upd_w2, upd_b2=upd_b2,
                gate_w=gate_w, gate_b=gate_b)


# ----------------------------------------------------------------------------
# Pure-JAX reference (mirrors the PyTorch semantics) for verification.
# ----------------------------------------------------------------------------
def gnn_layer_ref(features, p):
    N, F = features.shape
    if N <= 1:
        return features
    target = features[0:1]
    paths = features[1:]
    comb = jnp.concatenate([jnp.broadcast_to(target, paths.shape), paths], axis=1)
    h = jax.nn.relu(comb @ p["attn_w1"] + p["attn_b1"])
    attn = jax.nn.sigmoid(h @ p["attn_w2"] + p["attn_b2"])
    s = attn.sum()
    attn = jnp.where(s > 0, attn / s, attn)
    agg = (paths * attn).sum(axis=0, keepdims=True)
    comb2 = jnp.concatenate([target, agg], axis=1)
    gate = jax.nn.sigmoid(comb2 @ p["gate_w"] + p["gate_b"])
    upd = jax.nn.relu(comb2 @ p["upd_w1"] + p["upd_b1"]) @ p["upd_w2"] + p["upd_b2"]
    new_t = target + gate * upd
    return jnp.concatenate([new_t, paths], axis=0)


def gnn_processor_ref(features, layer_params):
    cur = features
    for p in layer_params:
        cur = gnn_layer_ref(cur, p)
    return cur


# ----------------------------------------------------------------------------
if __name__ == "__main__":
    FEATURE_DIM = 32   # hidden
    NUM_NODES = 8      # seq: 1 target + 7 path states
    NUM_LAYERS = 2

    root = jax.random.PRNGKey(0)
    k_feat, k_params = jax.random.split(root)
    features = jax.random.normal(k_feat, (NUM_NODES, FEATURE_DIM), jnp.float32)

    layer_keys = jax.random.split(k_params, NUM_LAYERS)
    layer_params = [init_gnn_layer_params(k, FEATURE_DIM) for k in layer_keys]

    out = gnn_processor(features, layer_params)
    out = jax.block_until_ready(out)

    ref = jax.block_until_ready(gnn_processor_ref(features, layer_params))
    assert out.shape == (NUM_NODES, FEATURE_DIM)
    assert jnp.allclose(out, ref, rtol=1e-4, atol=1e-4), "mismatch vs JAX reference"

    print("KERNEL_OK")
</pallas_src>

<mosaic_0001>
module attributes {stable_mosaic.version = 11 : i64} {
  func.func @_gnn_fused_kernel(%arg0: memref<8x32xf32, #tpu.memory_space<vmem>>, %arg1: memref<32x256xf32, #tpu.memory_space<vmem>>, %arg2: memref<2x32x128xf32, #tpu.memory_space<vmem>>, %arg3: memref<1x256xf32, #tpu.memory_space<vmem>>, %arg4: memref<2x128xf32, #tpu.memory_space<vmem>>, %arg5: memref<2xf32, #tpu.memory_space<smem>>, %arg6: memref<2x32x64xf32, #tpu.memory_space<vmem>>, %arg7: memref<2x32x64xf32, #tpu.memory_space<vmem>>, %arg8: memref<2x64xf32, #tpu.memory_space<vmem>>, %arg9: memref<2x32x32xf32, #tpu.memory_space<vmem>>, %arg10: memref<2x32xf32, #tpu.memory_space<vmem>>, %arg11: memref<8x32xf32, #tpu.memory_space<vmem>>) attributes {dimension_semantics = [], scalar_prefetch = 0 : i64, scratch_operands = 0 : i64, tpu.core_type = #tpu.core_type<tc>} {
    %c0 = arith.constant 0 : index
    %c0_0 = arith.constant 0 : index
    %0 = vector.load %arg0[%c0, %c0_0] : memref<8x32xf32, #tpu.memory_space<vmem>>, vector<8x32xf32>
    %1 = tpu.iota {dimensions = array<i32: 0>} : vector<8x1xi32>
    %c1_i32 = arith.constant 1 : i32
    %2 = vector.broadcast %c1_i32 : i32 to vector<8x1xi32>
    %3 = arith.cmpi sge, %1, %2 : vector<8x1xi32>
    %4 = arith.extui %3 : vector<8x1xi1> to vector<8x1xi32>
    %5 = arith.sitofp %4 : vector<8x1xi32> to vector<8x1xf32>
    %c0_1 = arith.constant 0 : index
    %c0_2 = arith.constant 0 : index
    %6 = vector.load %arg1[%c0_1, %c0_2] : memref<32x256xf32, #tpu.memory_space<vmem>>, vector<32x256xf32>
    %cst = arith.constant dense<0.000000e+00> : vector<8x256xf32>
    %7 = tpu.matmul %0, %6, %cst {dimension_numbers = #tpu.dot_dimension_numbers<[1], [0], [0], [1], [0, 0, 1, 1], [], []>} : vector<8x32xf32>, vector<32x256xf32>, vector<8x256xf32> -> vector<8x256xf32>
    %8 = vector.extract_strided_slice %0 {offsets = [0, 0], sizes = [1, 32], strides = [1, 1]} : vector<8x32xf32> to vector<1x32xf32>
    %c0_3 = arith.constant 0 : index
    %c0_4 = arith.constant 0 : index
    %c0_5 = arith.constant 0 : index
    %9 = vector.load %arg2[%c0_3, %c0_4, %c0_5] : memref<2x32x128xf32, #tpu.memory_space<vmem>>, vector<1x32x128xf32>
    %10 = vector.shape_cast %9 : vector<1x32x128xf32> to vector<32x128xf32>
    %cst_6 = arith.constant dense<0.000000e+00> : vector<1x128xf32>
    %11 = tpu.matmul %8, %10, %cst_6 {dimension_numbers = #tpu.dot_dimension_numbers<[1], [0], [0], [1], [0, 0, 1, 1], [], []>} : vector<1x32xf32>, vector<32x128xf32>, vector<1x128xf32> -> vector<1x128xf32>
    %c0_7 = arith.constant 0 : index
    %c0_8 = arith.constant 0 : index
    %12 = vector.load %arg3[%c0_7, %c0_8] : memref<1x256xf32, #tpu.memory_space<vmem>>, vector<1x128xf32>
    %13 = arith.addf %11, %12 : vector<1x128xf32>
    %14 = vector.extract_strided_slice %7 {offsets = [0, 0], sizes = [8, 128], strides = [1, 1]} : vector<8x256xf32> to vector<8x128xf32>
    %15 = vector.broadcast %13 : vector<1x128xf32> to vector<8x128xf32>
    %16 = arith.addf %14, %15 : vector<8x128xf32>
    %cst_9 = arith.constant 0.000000e+00 : f32
    %17 = vector.broadcast %cst_9 : f32 to vector<8x128xf32>
    %18 = arith.maximumf %16, %17 : vector<8x128xf32>
    %c0_10 = arith.constant 0 : index
    %c0_11 = arith.constant 0 : index
    %19 = vector.load %arg4[%c0_10, %c0_11] : memref<2x128xf32, #tpu.memory_space<vmem>>, vector<1x128xf32>
    %20 = vector.broadcast %19 : vector<1x128xf32> to vector<8x128xf32>
    %21 = arith.mulf %18, %20 : vector<8x128xf32>
    %cst_12 = arith.constant dense<0.000000e+00> : vector<8xf32>
    %22 = vector.multi_reduction <add>, %21, %cst_12 [1] : vector<8x128xf32> to vector<8xf32>
    %23 = vector.shape_cast %22 : vector<8xf32> to vector<8x1xf32>
    %c0_13 = arith.constant 0 : index
    %24 = memref.load %arg5[%c0_13] : memref<2xf32, #tpu.memory_space<smem>>
    %25 = vector.broadcast %24 : f32 to vector<8x1xf32>
    %26 = arith.addf %23, %25 : vector<8x1xf32>
    %27 = arith.negf %26 : vector<8x1xf32>
    %28 = math.exp %27 : vector<8x1xf32>
    %cst_14 = arith.constant 1.000000e+00 : f32
    %29 = vector.broadcast %cst_14 : f32 to vector<8x1xf32>
    %30 = arith.addf %29, %28 : vector<8x1xf32>
    %31 = arith.divf %29, %30 : vector<8x1xf32>
    %32 = arith.mulf %31, %5 : vector<8x1xf32>
    %33 = vector.shape_cast %32 : vector<8x1xf32> to vector<1x8x1xf32>
    %cst_15 = arith.constant dense<0.000000e+00> : vector<1xf32>
    %34 = vector.multi_reduction <add>, %33, %cst_15 [1, 2] : vector<1x8x1xf32> to vector<1xf32>
    %35 = vector.shape_cast %34 : vector<1xf32> to vector<1x1x1xf32>
    %36 = vector.extract %35[0, 0, 0] : f32 from vector<1x1x1xf32>
    %cst_16 = arith.constant 0.000000e+00 : f32
    %37 = arith.cmpf ogt, %36, %cst_16 : f32
    %cst_17 = arith.constant 1.000000e+00 : f32
    %38 = arith.divf %cst_17, %36 : f32
    %39 = vector.broadcast %38 : f32 to vector<8x1xf32>
    %40 = arith.mulf %32, %39 : vector<8x1xf32>
    %41 = arith.select %37, %40, %32 : vector<8x1xf32>
    %42 = vector.broadcast %41 : vector<8x1xf32> to vector<8x32xf32>
    %43 = arith.mulf %0, %42 : vector<8x32xf32>
    %cst_18 = arith.constant dense<0.000000e+00> : vector<32xf32>
    %44 = vector.multi_reduction <add>, %43, %cst_18 [0] : vector<8x32xf32> to vector<32xf32>
    %45 = vector.shape_cast %44 : vector<32xf32> to vector<1x32xf32>
    %c0_19 = arith.constant 0 : index
    %c0_20 = arith.constant 0 : index
    %c0_21 = arith.constant 0 : index
    %46 = vector.load %arg6[%c0_19, %c0_20, %c0_21] : memref<2x32x64xf32, #tpu.memory_space<vmem>>, vector<1x32x64xf32>
    %47 = vector.shape_cast %46 : vector<1x32x64xf32> to vector<32x64xf32>
    %cst_22 = arith.constant dense<0.000000e+00> : vector<1x64xf32>
    %48 = tpu.matmul %8, %47, %cst_22 {dimension_numbers = #tpu.dot_dimension_numbers<[1], [0], [0], [1], [0, 0, 1, 1], [], []>} : vector<1x32xf32>, vector<32x64xf32>, vector<1x64xf32> -> vector<1x64xf32>
    %c0_23 = arith.constant 0 : index
    %c0_24 = arith.constant 0 : index
    %c0_25 = arith.constant 0 : index
    %49 = vector.load %arg7[%c0_23, %c0_24, %c0_25] : memref<2x32x64xf32, #tpu.memory_space<vmem>>, vector<1x32x64xf32>
    %50 = vector.shape_cast %49 : vector<1x32x64xf32> to vector<32x64xf32>
    %cst_26 = arith.constant dense<0.000000e+00> : vector<1x64xf32>
    %51 = tpu.matmul %45, %50, %cst_26 {dimension_numbers = #tpu.dot_dimension_numbers<[1], [0], [0], [1], [0, 0, 1, 1], [], []>} : vector<1x32xf32>, vector<32x64xf32>, vector<1x64xf32> -> vector<1x64xf32>
    %52 = arith.addf %48, %51 : vector<1x64xf32>
    %c0_27 = arith.constant 0 : index
    %c0_28 = arith.constant 0 : index
    %53 = vector.load %arg8[%c0_27, %c0_28] : memref<2x64xf32, #tpu.memory_space<vmem>>, vector<1x64xf32>
    %54 = arith.addf %52, %53 : vector<1x64xf32>
    %55 = vector.extract_strided_slice %54 {offsets = [0, 0], sizes = [1, 32], strides = [1, 1]} : vector<1x64xf32> to vector<1x32xf32>
    %56 = arith.negf %55 : vector<1x32xf32>
    %57 = math.exp %56 : vector<1x32xf32>
    %cst_29 = arith.constant 1.000000e+00 : f32
    %58 = vector.broadcast %cst_29 : f32 to vector<1x32xf32>
    %59 = arith.addf %58, %57 : vector<1x32xf32>
    %60 = arith.divf %58, %59 : vector<1x32xf32>
    %61 = vector.extract_strided_slice %54 {offsets = [0, 32], sizes = [1, 32], strides = [1, 1]} : vector<1x64xf32> to vector<1x32xf32>
    %cst_30 = arith.constant 0.000000e+00 : f32
    %62 = vector.broadcast %cst_30 : f32 to vector<1x32xf32>
    %63 = arith.maximumf %61, %62 : vector<1x32xf32>
    %c0_31 = arith.constant 0 : index
    %c0_32 = arith.constant 0 : index
    %c0_33 = arith.constant 0 : index
    %64 = vector.load %arg9[%c0_31, %c0_32, %c0_33] : memref<2x32x32xf32, #tpu.memory_space<vmem>>, vector<1x32x32xf32>
    %65 = vector.shape_cast %64 : vector<1x32x32xf32> to vector<32x32xf32>
    %cst_34 = arith.constant dense<0.000000e+00> : vector<1x32xf32>
    %66 = tpu.matmul %63, %65, %cst_34 {dimension_numbers = #tpu.dot_dimension_numbers<[1], [0], [0], [1], [0, 0, 1, 1], [], []>} : vector<1x32xf32>, vector<32x32xf32>, vector<1x32xf32> -> vector<1x32xf32>
    %c0_35 = arith.constant 0 : index
    %c0_36 = arith.constant 0 : index
    %67 = vector.load %arg10[%c0_35, %c0_36] : memref<2x32xf32, #tpu.memory_space<vmem>>, vector<1x32xf32>
    %68 = arith.addf %66, %67 : vector<1x32xf32>
    %69 = arith.mulf %60, %68 : vector<1x32xf32>
    %70 = arith.addf %8, %69 : vector<1x32xf32>
    %c1 = arith.constant 1 : index
    %c0_37 = arith.constant 0 : index
    %c0_38 = arith.constant 0 : index
    %71 = vector.load %arg2[%c1, %c0_37, %c0_38] : memref<2x32x128xf32, #tpu.memory_space<vmem>>, vector<1x32x128xf32>
    %72 = vector.shape_cast %71 : vector<1x32x128xf32> to vector<32x128xf32>
    %cst_39 = arith.constant dense<0.000000e+00> : vector<1x128xf32>
    %73 = tpu.matmul %70, %72, %cst_39 {dimension_numbers = #tpu.dot_dimension_numbers<[1], [0], [0], [1], [0, 0, 1, 1], [], []>} : vector<1x32xf32>, vector<32x128xf32>, vector<1x128xf32> -> vector<1x128xf32>
    %c0_40 = arith.constant 0 : index
    %c128 = arith.constant 128 : index
    %74 = vector.load %arg3[%c0_40, %c128] : memref<1x256xf32, #tpu.memory_space<vmem>>, vector<1x128xf32>
    %75 = arith.addf %73, %74 : vector<1x128xf32>
    %76 = vector.extract_strided_slice %7 {offsets = [0, 128], sizes = [8, 128], strides = [1, 1]} : vector<8x256xf32> to vector<8x128xf32>
    %77 = vector.broadcast %75 : vector<1x128xf32> to vector<8x128xf32>
    %78 = arith.addf %76, %77 : vector<8x128xf32>
    %cst_41 = arith.constant 0.000000e+00 : f32
    %79 = vector.broadcast %cst_41 : f32 to vector<8x128xf32>
    %80 = arith.maximumf %78, %79 : vector<8x128xf32>
    %c1_42 = arith.constant 1 : index
    %c0_43 = arith.constant 0 : index
    %81 = vector.load %arg4[%c1_42, %c0_43] : memref<2x128xf32, #tpu.memory_space<vmem>>, vector<1x128xf32>
    %82 = vector.broadcast %81 : vector<1x128xf32> to vector<8x128xf32>
    %83 = arith.mulf %80, %82 : vector<8x128xf32>
    %cst_44 = arith.constant dense<0.000000e+00> : vector<8xf32>
    %84 = vector.multi_reduction <add>, %83, %cst_44 [1] : vector<8x128xf32> to vector<8xf32>
    %85 = vector.shape_cast %84 : vector<8xf32> to vector<8x1xf32>
    %c1_45 = arith.constant 1 : index
    %86 = memref.load %arg5[%c1_45] : memref<2xf32, #tpu.memory_space<smem>>
    %87 = vector.broadcast %86 : f32 to vector<8x1xf32>
    %88 = arith.addf %85, %87 : vector<8x1xf32>
    %89 = arith.negf %88 : vector<8x1xf32>
    %90 = math.exp %89 : vector<8x1xf32>
    %cst_46 = arith.constant 1.000000e+00 : f32
    %91 = vector.broadcast %cst_46 : f32 to vector<8x1xf32>
    %92 = arith.addf %91, %90 : vector<8x1xf32>
    %93 = arith.divf %91, %92 : vector<8x1xf32>
    %94 = arith.mulf %93, %5 : vector<8x1xf32>
    %95 = vector.shape_cast %94 : vector<8x1xf32> to vector<1x8x1xf32>
    %cst_47 = arith.constant dense<0.000000e+00> : vector<1xf32>
    %96 = vector.multi_reduction <add>, %95, %cst_47 [1, 2] : vector<1x8x1xf32> to vector<1xf32>
    %97 = vector.shape_cast %96 : vector<1xf32> to vector<1x1x1xf32>
    %98 = vector.extract %97[0, 0, 0] : f32 from vector<1x1x1xf32>
    %cst_48 = arith.constant 0.000000e+00 : f32
    %99 = arith.cmpf ogt, %98, %cst_48 : f32
    %cst_49 = arith.constant 1.000000e+00 : f32
    %100 = arith.divf %cst_49, %98 : f32
    %101 = vector.broadcast %100 : f32 to vector<8x1xf32>
    %102 = arith.mulf %94, %101 : vector<8x1xf32>
    %103 = arith.select %99, %102, %94 : vector<8x1xf32>
    %104 = vector.broadcast %103 : vector<8x1xf32> to vector<8x32xf32>
    %105 = arith.mulf %0, %104 : vector<8x32xf32>
    %cst_50 = arith.constant dense<0.000000e+00> : vector<32xf32>
    %106 = vector.multi_reduction <add>, %105, %cst_50 [0] : vector<8x32xf32> to vector<32xf32>
    %107 = vector.shape_cast %106 : vector<32xf32> to vector<1x32xf32>
    %c1_51 = arith.constant 1 : index
    %c0_52 = arith.constant 0 : index
    %c0_53 = arith.constant 0 : index
    %108 = vector.load %arg6[%c1_51, %c0_52, %c0_53] : memref<2x32x64xf32, #tpu.memory_space<vmem>>, vector<1x32x64xf32>
    %109 = vector.shape_cast %108 : vector<1x32x64xf32> to vector<32x64xf32>
    %cst_54 = arith.constant dense<0.000000e+00> : vector<1x64xf32>
    %110 = tpu.matmul %70, %109, %cst_54 {dimension_numbers = #tpu.dot_dimension_numbers<[1], [0], [0], [1], [0, 0, 1, 1], [], []>} : vector<1x32xf32>, vector<32x64xf32>, vector<1x64xf32> -> vector<1x64xf32>
    %c1_55 = arith.constant 1 : index
    %c0_56 = arith.constant 0 : index
    %c0_57 = arith.constant 0 : index
    %111 = vector.load %arg7[%c1_55, %c0_56, %c0_57] : memref<2x32x64xf32, #tpu.memory_space<vmem>>, vector<1x32x64xf32>
    %112 = vector.shape_cast %111 : vector<1x32x64xf32> to vector<32x64xf32>
    %cst_58 = arith.constant dense<0.000000e+00> : vector<1x64xf32>
    %113 = tpu.matmul %107, %112, %cst_58 {dimension_numbers = #tpu.dot_dimension_numbers<[1], [0], [0], [1], [0, 0, 1, 1], [], []>} : vector<1x32xf32>, vector<32x64xf32>, vector<1x64xf32> -> vector<1x64xf32>
    %114 = arith.addf %110, %113 : vector<1x64xf32>
    %c1_59 = arith.constant 1 : index
    %c0_60 = arith.constant 0 : index
    %115 = vector.load %arg8[%c1_59, %c0_60] : memref<2x64xf32, #tpu.memory_space<vmem>>, vector<1x64xf32>
    %116 = arith.addf %114, %115 : vector<1x64xf32>
    %117 = vector.extract_strided_slice %116 {offsets = [0, 0], sizes = [1, 32], strides = [1, 1]} : vector<1x64xf32> to vector<1x32xf32>
    %118 = arith.negf %117 : vector<1x32xf32>
    %119 = math.exp %118 : vector<1x32xf32>
    %cst_61 = arith.constant 1.000000e+00 : f32
    %120 = vector.broadcast %cst_61 : f32 to vector<1x32xf32>
    %121 = arith.addf %120, %119 : vector<1x32xf32>
    %122 = arith.divf %120, %121 : vector<1x32xf32>
    %123 = vector.extract_strided_slice %116 {offsets = [0, 32], sizes = [1, 32], strides = [1, 1]} : vector<1x64xf32> to vector<1x32xf32>
    %cst_62 = arith.constant 0.000000e+00 : f32
    %124 = vector.broadcast %cst_62 : f32 to vector<1x32xf32>
    %125 = arith.maximumf %123, %124 : vector<1x32xf32>
    %c1_63 = arith.constant 1 : index
    %c0_64 = arith.constant 0 : index
    %c0_65 = arith.constant 0 : index
    %126 = vector.load %arg9[%c1_63, %c0_64, %c0_65] : memref<2x32x32xf32, #tpu.memory_space<vmem>>, vector<1x32x32xf32>
    %127 = vector.shape_cast %126 : vector<1x32x32xf32> to vector<32x32xf32>
    %cst_66 = arith.constant dense<0.000000e+00> : vector<1x32xf32>
    %128 = tpu.matmul %125, %127, %cst_66 {dimension_numbers = #tpu.dot_dimension_numbers<[1], [0], [0], [1], [0, 0, 1, 1], [], []>} : vector<1x32xf32>, vector<32x32xf32>, vector<1x32xf32> -> vector<1x32xf32>
    %c1_67 = arith.constant 1 : index
    %c0_68 = arith.constant 0 : index
    %129 = vector.load %arg10[%c1_67, %c0_68] : memref<2x32xf32, #tpu.memory_space<vmem>>, vector<1x32xf32>
    %130 = arith.addf %128, %129 : vector<1x32xf32>
    %131 = arith.mulf %122, %130 : vector<1x32xf32>
    %132 = arith.addf %70, %131 : vector<1x32xf32>
    %c0_69 = arith.constant 0 : index
    %c0_70 = arith.constant 0 : index
    %133 = vector.load %arg11[%c0_69, %c0_70] : memref<8x32xf32, #tpu.memory_space<vmem>>, vector<8x32xf32>
    tpu.vector_store %arg11[%c0_69, %c0_70], %0 {strides = array<i32>} : memref<8x32xf32, #tpu.memory_space<vmem>>, vector<8x32xf32>,
    %c0_71 = arith.constant 0 : index
    %c0_72 = arith.constant 0 : index
    %134 = vector.load %arg11[%c0_71, %c0_72] : memref<8x32xf32, #tpu.memory_space<vmem>>, vector<1x32xf32>
    tpu.vector_store %arg11[%c0_71, %c0_72], %132 {strides = array<i32>} : memref<8x32xf32, #tpu.memory_space<vmem>>, vector<1x32xf32>,
    return
  }
}

</mosaic_0001>

<llo_original>
// kernel: tpu_custom_call.1
$region0: #{tpu_custom_call.1}
  #allocation0 [shape = 'u32[]', space=smem, size = 0x4, offset = 0x4, fixed_abs, tag = 'smem constant byte address 0x4 - core index']
  #allocation1 [shape = 'u32[144,128]{1,0:T(1,128)}', space=vmem, size = 0x12000, scoped, tag = 'internal scratch']
  %s0 = inlined_call_operand.hbm [shape: f32[8,32], index: 0, kind: input, shape index: {}]
  %s1 = inlined_call_operand.hbm [shape: f32[32,256], index: 1, kind: input, shape index: {}]
  %s2 = inlined_call_operand.hbm [shape: f32[2,32,128], index: 2, kind: input, shape index: {}]
  %s3 = inlined_call_operand.vmem [shape: f32[1,256], index: 3, kind: input, shape index: {}]
  %s4 = inlined_call_operand.vmem [shape: f32[2,128], index: 4, kind: input, shape index: {}]
  %s5 = inlined_call_operand.vmem [shape: f32[2], index: 5, kind: input, shape index: {}]
  %s6 = inlined_call_operand.hbm [shape: f32[2,32,64], index: 6, kind: input, shape index: {}]
  %s7 = inlined_call_operand.hbm [shape: f32[2,32,64], index: 7, kind: input, shape index: {}]
  %s8 = inlined_call_operand.vmem [shape: f32[2,64], index: 8, kind: input, shape index: {}]
  %s9 = inlined_call_operand.hbm [shape: f32[2,32,32], index: 9, kind: input, shape index: {}]
  %s10 = inlined_call_operand.vmem [shape: f32[2,32], index: 10, kind: input, shape index: {}]
  %s11 = inlined_call_operand.hbm [shape: f32[8,32], index: 11, kind: output, shape index: {}]
  %s12 = sld [smem:[#allocation0]]
  $region82: #{tpu_custom_call.1} parent=0
    _
  %s14 = ssub.s32 1, %s12
  %s15 = scalar_select 0, %s14, %s12
  $region1: #{tpu_custom_call.1} parent=0
    #allocation2 [shape = 'u8[4096]{0}', space=vmem, size = 0x1000, scoped, tag = 'input window, operand 0, single buffered']
    #allocation3 [shape = 's32[1]{0}', space=sflag, size = 0x4, scoped, tag = 'scoped memory for tpu_custom_call.1']
    #allocation4 [shape = 's32[1]{0}', space=sflag, size = 0x4, scoped, tag = 'scoped memory for tpu_custom_call.1']
    #allocation5 [shape = 's32[1]{0}', space=sflag, size = 0x4, scoped, tag = 'scoped memory for tpu_custom_call.1']
    #allocation6 [shape = 'u8[32768]{0}', space=vmem, size = 0x8000, scoped, tag = 'input window, operand 1, single buffered']
    #allocation7 [shape = 's32[1]{0}', space=sflag, size = 0x4, scoped, tag = 'scoped memory for tpu_custom_call.1']
    #allocation8 [shape = 'u8[32768]{0}', space=vmem, size = 0x8000, scoped, tag = 'input window, operand 2, single buffered']
    #allocation9 [shape = 'u8[512]{0}', space=smem, size = 0x200, scoped, tag = 'input window, operand 5, single buffered']
    #allocation10 [shape = 'u8[32768]{0}', space=vmem, size = 0x8000, scoped, tag = 'input window, operand 6, single buffered']
    #allocation11 [shape = 's32[1]{0}', space=sflag, size = 0x4, scoped, tag = 'scoped memory for tpu_custom_call.1']
    #allocation12 [shape = 'u8[32768]{0}', space=vmem, size = 0x8000, scoped, tag = 'input window, operand 7, single buffered']
    #allocation13 [shape = 'u8[32768]{0}', space=vmem, size = 0x8000, scoped, tag = 'input window, operand 9, single buffered']
    #allocation14 [shape = 's32[1]{0}', space=sflag, size = 0x4, scoped, tag = 'scoped memory for tpu_custom_call.1']
    #allocation15 [shape = 'u8[4096]{0}', space=vmem, size = 0x1000, scoped, tag = 'output window, operand 0, single buffered']
    %16 = vsyncpa [#allocation3], 0
    %17 = vsyncpa [#allocation7], 0
    %18 = vsyncpa [#allocation5], 0
    %19 = vsyncpa [#allocation11], 0
    %20 = vsyncpa [#allocation14], 0
    %21 = vsyncpa [#allocation4], 0
    // Predicated region
    $region2: #{tpu_custom_call.1} parent=1 // pred_check
      _
    $region3: #{tpu_custom_call.1} parent=1 // pred_check_branch
      %23 = sbr.rel (0) target = $region5
    $region4: #{tpu_custom_call.1} parent=1 // pred_region
      %s25 = ssub.s32 128, 128
      %26 = vsyncadd [#allocation3], %s25
      %s28 = sshll.u32 [#allocation2], 4
      %s29 = int_to_ptr.vmem [resolvable:$true] %s28
      %31 = dma.hbm_to_vmem [thread:$0]  %s0, 128, %s29, [#allocation3]
    $region5: #{tpu_custom_call.1} parent=1 // pred_fallthru
      _
    // Predicated region
    $region6: #{tpu_custom_call.1} parent=1 // pred_check
      _
    $region7: #{tpu_custom_call.1} parent=1 // pred_check_branch
      %33 = sbr.rel (0) target = $region9
    $region8: #{tpu_custom_call.1} parent=1 // pred_region
      %s35 = ssub.s32 1024, 1024
      %36 = vsyncadd [#allocation7], %s35
      %s37 = sshll.u32 [#allocation6], 4
      %s38 = int_to_ptr.vmem [resolvable:$true] %s37
      %43 = dma.hbm_to_vmem [thread:$0]  %s1, 1024, %s38, [#allocation7], 256, 256, 16
    $region9: #{tpu_custom_call.1} parent=1 // pred_fallthru
      _
    // Predicated region
    $region10: #{tpu_custom_call.1} parent=1 // pred_check
      _
    $region11: #{tpu_custom_call.1} parent=1 // pred_check_branch
      %45 = sbr.rel (0) target = $region13
    $region12: #{tpu_custom_call.1} parent=1 // pred_region
      %s47 = ssub.s32 1024, 1024
      %48 = vsyncadd [#allocation7], %s47
      %s49 = sshll.u32 [#allocation8], 4
      %s50 = int_to_ptr.vmem [resolvable:$true] %s49
      %55 = dma.hbm_to_vmem [thread:$0]  %s2, 1024, %s50, [#allocation7], 128, 128, 8
    $region13: #{tpu_custom_call.1} parent=1 // pred_fallthru
      _
    // Predicated region
    $region14: #{tpu_custom_call.1} parent=1 // pred_check
      _
    $region15: #{tpu_custom_call.1} parent=1 // pred_check_branch
      %57 = sbr.rel (0) target = $region17
    $region16: #{tpu_custom_call.1} parent=1 // pred_region
      _
    $region17: #{tpu_custom_call.1} parent=1 // pred_fallthru
      _
    // Predicated region
    $region18: #{tpu_custom_call.1} parent=1 // pred_check
      _
    $region19: #{tpu_custom_call.1} parent=1 // pred_check_branch
      %59 = sbr.rel (0) target = $region21
    $region20: #{tpu_custom_call.1} parent=1 // pred_region
      _
    $region21: #{tpu_custom_call.1} parent=1 // pred_fallthru
      _
    // Predicated region
    $region22: #{tpu_custom_call.1} parent=1 // pred_check
      _
    $region23: #{tpu_custom_call.1} parent=1 // pred_check_branch
      %61 = sbr.rel (0) target = $region25
    $region24: #{tpu_custom_call.1} parent=1 // pred_region
      %s63 = ssub.s32 16, 16
      %64 = vsyncadd [#allocation5], %s63
      %s66 = sshll.u32 %s5, 4
      %s67 = int_to_ptr.vmem [resolvable:$true] %s66
      %69 = dma.vmem_to_smem %s67, 16, [#allocation9], [#allocation5]
    $region25: #{tpu_custom_call.1} parent=1 // pred_fallthru
      _
    // Predicated region
    $region26: #{tpu_custom_call.1} parent=1 // pred_check
      _
    $region27: #{tpu_custom_call.1} parent=1 // pred_check_branch
      %71 = sbr.rel (0) target = $region29
    $region28: #{tpu_custom_call.1} parent=1 // pred_region
      %s73 = ssub.s32 1024, 1024
      %74 = vsyncadd [#allocation11], %s73
      %s75 = sshll.u32 [#allocation10], 4
      %s76 = int_to_ptr.vmem [resolvable:$true] %s75
      %81 = dma.hbm_to_vmem [thread:$0]  %s6, 1024, %s76, [#allocation11], 128, 128, 8
    $region29: #{tpu_custom_call.1} parent=1 // pred_fallthru
      _
    // Predicated region
    $region30: #{tpu_custom_call.1} parent=1 // pred_check
      _
    $region31: #{tpu_custom_call.1} parent=1 // pred_check_branch
      %83 = sbr.rel (0) target = $region33
    $region32: #{tpu_custom_call.1} parent=1 // pred_region
      %s85 = ssub.s32 1024, 1024
      %86 = vsyncadd [#allocation11], %s85
      %s87 = sshll.u32 [#allocation12], 4
      %s88 = int_to_ptr.vmem [resolvable:$true] %s87
      %93 = dma.hbm_to_vmem [thread:$0]  %s7, 1024, %s88, [#allocation11], 128, 128, 8
    $region33: #{tpu_custom_call.1} parent=1 // pred_fallthru
      _
    // Predicated region
    $region34: #{tpu_custom_call.1} parent=1 // pred_check
      _
    $region35: #{tpu_custom_call.1} parent=1 // pred_check_branch
      %95 = sbr.rel (0) target = $region37
    $region36: #{tpu_custom_call.1} parent=1 // pred_region
      _
    $region37: #{tpu_custom_call.1} parent=1 // pred_fallthru
      _
    // Predicated region
    $region38: #{tpu_custom_call.1} parent=1 // pred_check
      _
    $region39: #{tpu_custom_call.1} parent=1 // pred_check_branch
      %97 = sbr.rel (0) target = $region41
    $region40: #{tpu_custom_call.1} parent=1 // pred_region
      %s99 = ssub.s32 1024, 1024
      %100 = vsyncadd [#allocation14], %s99
      %s101 = sshll.u32 [#allocation13], 4
      %s102 = int_to_ptr.vmem [resolvable:$true] %s101
      %107 = dma.hbm_to_vmem [thread:$0]  %s9, 1024, %s102, [#allocation14], 128, 128, 8
    $region41: #{tpu_custom_call.1} parent=1 // pred_fallthru
      _
    // Predicated region
    $region42: #{tpu_custom_call.1} parent=1 // pred_check
      _
    $region43: #{tpu_custom_call.1} parent=1 // pred_check_branch
      %109 = sbr.rel (0) target = $region45
    $region44: #{tpu_custom_call.1} parent=1 // pred_region
      _
    $region45: #{tpu_custom_call.1} parent=1 // pred_fallthru
      _
    // Predicated region
    $region46: #{tpu_custom_call.1} parent=1 // pred_check
      _
    $region47: #{tpu_custom_call.1} parent=1 // pred_check_branch
      %111 = sbr.rel (0) target = $region49
    $region48: #{tpu_custom_call.1} parent=1 // pred_region
      %112 = dma.done [#allocation3], 128
    $region49: #{tpu_custom_call.1} parent=1 // pred_fallthru
      _
    // Predicated region
    $region50: #{tpu_custom_call.1} parent=1 // pred_check
      _
    $region51: #{tpu_custom_call.1} parent=1 // pred_check_branch
      %114 = sbr.rel (0) target = $region53
    $region52: #{tpu_custom_call.1} parent=1 // pred_region
      %115 = dma.done [#allocation7], 1024
    $region53: #{tpu_custom_call.1} parent=1 // pred_fallthru
      _
    // Predicated region
    $region54: #{tpu_custom_call.1} parent=1 // pred_check
      _
    $region55: #{tpu_custom_call.1} parent=1 // pred_check_branch
      %117 = sbr.rel (0) target = $region57
    $region56: #{tpu_custom_call.1} parent=1 // pred_region
      %118 = dma.done [#allocation7], 1024
    $region57: #{tpu_custom_call.1} parent=1 // pred_fallthru
      _
    // Predicated region
    $region58: #{tpu_custom_call.1} parent=1 // pred_check
      _
    $region59: #{tpu_custom_call.1} parent=1 // pred_check_branch
      %120 = sbr.rel (0) target = $region61
    $region60: #{tpu_custom_call.1} parent=1 // pred_region
      %121 = dma.done [#allocation5], 16
    $region61: #{tpu_custom_call.1} parent=1 // pred_fallthru
      _
    // Predicated region
    $region62: #{tpu_custom_call.1} parent=1 // pred_check
      _
    $region63: #{tpu_custom_call.1} parent=1 // pred_check_branch
      %123 = sbr.rel (0) target = $region65
    $region64: #{tpu_custom_call.1} parent=1 // pred_region
      %124 = dma.done [#allocation11], 1024
    $region65: #{tpu_custom_call.1} parent=1 // pred_fallthru
      _
    // Predicated region
    $region66: #{tpu_custom_call.1} parent=1 // pred_check
      _
    $region67: #{tpu_custom_call.1} parent=1 // pred_check_branch
      %126 = sbr.rel (0) target = $region69
    $region68: #{tpu_custom_call.1} parent=1 // pred_region
      %127 = dma.done [#allocation11], 1024
    $region69: #{tpu_custom_call.1} parent=1 // pred_fallthru
      _
    // Predicated region
    $region70: #{tpu_custom_call.1} parent=1 // pred_check
      _
    $region71: #{tpu_custom_call.1} parent=1 // pred_check_branch
      %129 = sbr.rel (0) target = $region73
    $region72: #{tpu_custom_call.1} parent=1 // pred_region
      %130 = dma.done [#allocation14], 1024
    $region73: #{tpu_custom_call.1} parent=1 // pred_fallthru
      _
    %131 = sfence
    %v132 = vld [vmem:[#allocation2] sm:$0xff]
    %v133 = vlaneseq
    %v134 = vshrl.u32 %v133, 7
    %vm135 = vcmp.ge.s32.totalorder %v134, 1
    %v136 = vsel %vm135, 1, 0
    %v137 = vcvt.s32.f32 %v136
    %v138 = vld [vmem:[#allocation6] sm:$0xff]
    %v139 = vld [vmem:[#allocation6 + $0x8] sm:$0xff]
    %v140 = vld [vmem:[#allocation6 + $0x10] sm:$0xff]
    %v141 = vld [vmem:[#allocation6 + $0x18] sm:$0xff]
    %v142 = vld [vmem:[#allocation6 + $0x20] sm:$0xff]
    %v143 = vld [vmem:[#allocation6 + $0x28] sm:$0xff]
    %v144 = vld [vmem:[#allocation6 + $0x30] sm:$0xff]
    %v145 = vld [vmem:[#allocation6 + $0x38] sm:$0xff]
    %vm146 = vcmask 261120
    %v148 = vsel %vm146, %v132, 0
    %150 = vmatprep.subr.mxu0 %v139
    %151 = vmatpush1.msra.mxu0 %v138
    %152 = vmatprep.subr.mxu0 %v141
    %153 = vmatpush1.msra.mxu0 %v140
    %154 = vmatprep.subr.mxu0 %v143
    %155 = vmatpush1.msra.mxu0 %v142
    %156 = vmatprep.subr.mxu0 %v145
    %157 = vmatpush1.msra.mxu0 %v144
    %158 = vmatprep.subr.mxu0 0.0
    %159 = vmatpush1.msra.mxu0 0.0
    %160 = vmatprep.subr.mxu0 0.0
    %161 = vmatpush1.msra.mxu0 0.0
    %162 = vmatprep.subr.mxu0 0.0
    %163 = vmatpush1.msra.mxu0 0.0
    %164 = vmatprep.subr.mxu0 0.0
    %165 = vmatpush1.msra.mxu0 0.0
    %166 = vmatprep.subr.mxu0 0.0
    %167 = vmatpush1.msra.mxu0 0.0
    %168 = vmatprep.subr.mxu0 0.0
    %169 = vmatpush1.msra.mxu0 0.0
    %170 = vmatprep.subr.mxu0 0.0
    %171 = vmatpush1.msra.mxu0 0.0
    %172 = vmatprep.subr.mxu0 0.0
    %173 = vmatpush1.msra.mxu0 0.0
    %174 = vmatprep.subr.mxu0 0.0
    %175 = vmatpush1.msra.mxu0 0.0
    %176 = vmatprep.subr.mxu0 0.0
    %177 = vmatpush1.msra.mxu0 0.0
    %178 = vmatprep.subr.mxu0 0.0
    %179 = vmatpush1.msra.mxu0 0.0
    %180 = vmatprep.subr.mxu0 0.0
    %181 = vmatpush1.msra.mxu0 0.0
    %182 = vmatprep.subr.mxu0 0.0
    %183 = vmatpush1.msra.mxu0 0.0
    %184 = vmatprep.subr.mxu0 0.0
    %185 = vmatpush1.msra.mxu0 0.0
    %186 = vmatprep.subr.mxu0 0.0
    %187 = vmatpush1.msra.mxu0 0.0
    %188 = vmatprep.subr.mxu0 0.0
    %189 = vmatpush1.msra.mxu0 0.0
    %190 = vmatprep.subr.mxu0 0.0
    %191 = vmatpush1.msra.mxu0 0.0
    %192 = vmatprep.subr.mxu0 0.0
    %193 = vmatpush1.msra.mxu0 0.0
    %194 = vmatprep.subr.mxu0 0.0
    %195 = vmatpush1.msra.mxu0 0.0
    %196 = vmatprep.subr.mxu0 0.0
    %197 = vmatpush1.msra.mxu0 0.0
    %198 = vmatprep.subr.mxu0 0.0
    %199 = vmatpush1.msra.mxu0 0.0
    %200 = vmatprep.subr.mxu0 0.0
    %201 = vmatpush1.msra.mxu0 0.0
    %202 = vmatprep.subr.mxu0 0.0
    %203 = vmatpush1.msra.mxu0 0.0
    %204 = vmatprep.subr.mxu0 0.0
    %205 = vmatpush1.msra.mxu0 0.0
    %206 = vmatprep.subr.mxu0 0.0
    %207 = vmatpush1.msra.mxu0 0.0
    %208 = vmatprep.subr.mxu0 0.0
    %209 = vmatpush1.msra.mxu0 0.0
    %210 = vmatprep.subr.mxu0 0.0
    %211 = vmatpush1.msra.mxu0 0.0
    %212 = vmatprep.subr.mxu0 0.0
    %213 = vmatpush1.msra.mxu0 0.0
    %214 = vmatprep.mubr.f32.mxu0 0.0
    %215 = vmatmul.mubr.f32.gmra.mrb[0].mxu0 %v148
    %v216 = vpop.f32.mrb[0].mxu0
    %v217 = vadd.f32 0.0, %v216
    %v218 = vpop.f32.mrb[0].mxu0
    %v219 = vadd.f32 0.0, %v218
    %220 = vdwg.mxu0
    %v221 = vld [vmem:[#allocation8] sm:$0xff]
    %v222 = vld [vmem:[#allocation8 + $0x8] sm:$0xff]
    %v223 = vld [vmem:[#allocation8 + $0x10] sm:$0xff]
    %v224 = vld [vmem:[#allocation8 + $0x18] sm:$0xff]
    %v225 = vld [vmem:[%s3] sm:$0x1]
    %226 = vmatprep.subr.mxu0 0.0
    %227 = vmatpush1.msra.mxu0 %v221
    %228 = vmatprep.subr.mxu0 0.0
    %229 = vmatpush1.msra.mxu0 %v222
    %230 = vmatprep.subr.mxu0 0.0
    %231 = vmatpush1.msra.mxu0 %v223
    %232 = vmatprep.subr.mxu0 0.0
    %233 = vmatpush1.msra.mxu0 %v224
    %234 = vmatprep.subr.mxu0 0.0
    %235 = vmatpush1.msra.mxu0 0.0
    %236 = vmatprep.subr.mxu0 0.0
    %237 = vmatpush1.msra.mxu0 0.0
    %238 = vmatprep.subr.mxu0 0.0
    %239 = vmatpush1.msra.mxu0 0.0
    %240 = vmatprep.subr.mxu0 0.0
    %241 = vmatpush1.msra.mxu0 0.0
    %242 = vmatprep.subr.mxu0 0.0
    %243 = vmatpush1.msra.mxu0 0.0
    %244 = vmatprep.subr.mxu0 0.0
    %245 = vmatpush1.msra.mxu0 0.0
    %246 = vmatprep.subr.mxu0 0.0
    %247 = vmatpush1.msra.mxu0 0.0
    %248 = vmatprep.subr.mxu0 0.0
    %249 = vmatpush1.msra.mxu0 0.0
    %250 = vmatprep.subr.mxu0 0.0
    %251 = vmatpush1.msra.mxu0 0.0
    %252 = vmatprep.subr.mxu0 0.0
    %253 = vmatpush1.msra.mxu0 0.0
    %254 = vmatprep.subr.mxu0 0.0
    %255 = vmatpush1.msra.mxu0 0.0
    %256 = vmatprep.subr.mxu0 0.0
    %257 = vmatpush1.msra.mxu0 0.0
    %258 = vmatprep.subr.mxu0 0.0
    %259 = vmatpush1.msra.mxu0 0.0
    %260 = vmatprep.subr.mxu0 0.0
    %261 = vmatpush1.msra.mxu0 0.0
    %262 = vmatprep.subr.mxu0 0.0
    %263 = vmatpush1.msra.mxu0 0.0
    %264 = vmatprep.subr.mxu0 0.0
    %265 = vmatpush1.msra.mxu0 0.0
    %266 = vmatprep.subr.mxu0 0.0
    %267 = vmatpush1.msra.mxu0 0.0
    %268 = vmatprep.subr.mxu0 0.0
    %269 = vmatpush1.msra.mxu0 0.0
    %270 = vmatprep.subr.mxu0 0.0
    %271 = vmatpush1.msra.mxu0 0.0
    %272 = vmatprep.subr.mxu0 0.0
    %273 = vmatpush1.msra.mxu0 0.0
    %274 = vmatprep.subr.mxu0 0.0
    %275 = vmatpush1.msra.mxu0 0.0
    %276 = vmatprep.subr.mxu0 0.0
    %277 = vmatpush1.msra.mxu0 0.0
    %278 = vmatprep.subr.mxu0 0.0
    %279 = vmatpush1.msra.mxu0 0.0
    %280 = vmatprep.subr.mxu0 0.0
    %281 = vmatpush1.msra.mxu0 0.0
    %282 = vmatprep.subr.mxu0 0.0
    %283 = vmatpush1.msra.mxu0 0.0
    %284 = vmatprep.subr.mxu0 0.0
    %285 = vmatpush1.msra.mxu0 0.0
    %286 = vmatprep.subr.mxu0 0.0
    %287 = vmatpush1.msra.mxu0 0.0
    %288 = vmatprep.subr.mxu0 0.0
    %289 = vmatpush1.msra.mxu0 0.0
    %290 = vmatprep.mubr.f32.mxu0 0.0
    %291 = vmatmul.mubr.f32.gmra.mrb[0].mxu0 %v148
    %v292 = vpop.f32.mrb[0].mxu0
    %v293 = vadd.f32 %v225, %v292
    %v294 = vpop.f32.mrb[0].mxu0
    %295 = vdwg.mxu0
    %v296 = vlaneseq
    %v297 = vshrl.u32 %v296, 7
    %v298 = vsub.s32 0, %v297
    %v299 = vrot.slane %v293, %v298
    %v300 = vadd.f32 %v217, %v299
    %v301 = vmax.f32 %v300, 0.0
    %v302 = vld [vmem:[%s4] sm:$0x1]
    %v303 = vlaneseq
    %v304 = vshrl.u32 %v303, 7
    %v305 = vsub.s32 0, %v304
    %v306 = vrot.slane %v302, %v305
    %v307 = vmul.f32 %v301, %v306
    %308 = vadd.xlane.f32.xlu0 %v307
    %v309 = vpop.xlane.xlu0 %308
    %s310 = sld [smem:[#allocation9]]
    %v311 = vstv %s310
    %v312 = vadd.f32 %v309, %v311
    %v313 = vxor.u32 %v312, 2147483648
    %v314 = vmul.f32 %v313, 1.442695
    %v315 = vpow.pop %v314
    %v316 = vadd.f32 %v315, 1.0
    %v317 = vrcp.pop %v316
    %v318 = vmul.f32 1.0, %v317
    %v319 = vmul.f32 %v318, %v137
    %vm320 = vcmask 7168
    %v321 = vsel %vm320, %v319, 0.0
    %322 = vadd.xlane.f32.xlu0 %v321
    %v323 = vpop.xlane.xlu0 %322
    %v324 = vrot.slane %v323, 4
    %v325 = vadd.f32 %v323, %v324
    %v326 = vrot.slane %v325, 2
    %v327 = vadd.f32 %v325, %v326
    %v328 = vrot.slane %v327, 1
    %v329 = vadd.f32 %v327, %v328
    %s330 = vtos %v329
    %p331 = scmp.gt.f32.partialorder %s330, 0.0
    %v332 = vstv %s330
    %v333 = vrcp.pop %v332
    %s334 = vtos %v333
    %v335 = vstv %s334
    %v336 = vmul.f32 %v319, %v335
    %s337 = scalar_select %p331, 1, 0
    %v338 = vstv %s337
    %vm339 = vcmp.eq.s32.totalorder %v338, 1
    %v340 = vsel %vm339, %v336, %v319
    %v341 = vmul.f32 %v132, %v340
    %v342 = vsel %vm146, %v341, 0.0
    %v343 = vrot.slane %v342, 4
    %v344 = vadd.f32 %v342, %v343
    %v345 = vrot.slane %v344, 2
    %v346 = vadd.f32 %v344, %v345
    %v347 = vrot.slane %v346, 1
    %v348 = vadd.f32 %v346, %v347
    %v349 = vld [vmem:[#allocation10] sm:$0xff]
    %v350 = vld [vmem:[#allocation10 + $0x8] sm:$0xff]
    %v351 = vld [vmem:[#allocation10 + $0x10] sm:$0xff]
    %v352 = vld [vmem:[#allocation10 + $0x18] sm:$0xff]
    %v353 = vld [vmem:[#allocation12] sm:$0xff]
    %v354 = vld [vmem:[#allocation12 + $0x8] sm:$0xff]
    %v355 = vld [vmem:[#allocation12 + $0x10] sm:$0xff]
    %v356 = vld [vmem:[#allocation12 + $0x18] sm:$0xff]
    %v358 = vsel %vm146, %v348, 0
    %360 = vmatprep.subr.mxu0 0.0
    %361 = vmatpush1.msra.mxu0 %v353
    %362 = vmatprep.subr.mxu0 0.0
    %363 = vmatpush1.msra.mxu0 %v354
    %364 = vmatprep.subr.mxu0 0.0
    %365 = vmatpush1.msra.mxu0 %v355
    %366 = vmatprep.subr.mxu0 0.0
    %367 = vmatpush1.msra.mxu0 %v356
    %368 = vmatprep.subr.mxu0 0.0
    %369 = vmatpush1.msra.mxu0 0.0
    %370 = vmatprep.subr.mxu0 0.0
    %371 = vmatpush1.msra.mxu0 0.0
    %372 = vmatprep.subr.mxu0 0.0
    %373 = vmatpush1.msra.mxu0 0.0
    %374 = vmatprep.subr.mxu0 0.0
    %375 = vmatpush1.msra.mxu0 0.0
    %376 = vmatprep.subr.mxu0 0.0
    %377 = vmatpush1.msra.mxu0 0.0
    %378 = vmatprep.subr.mxu0 0.0
    %379 = vmatpush1.msra.mxu0 0.0
    %380 = vmatprep.subr.mxu0 0.0
    %381 = vmatpush1.msra.mxu0 0.0
    %382 = vmatprep.subr.mxu0 0.0
    %383 = vmatpush1.msra.mxu0 0.0
    %384 = vmatprep.subr.mxu0 0.0
    %385 = vmatpush1.msra.mxu0 0.0
    %386 = vmatprep.subr.mxu0 0.0
    %387 = vmatpush1.msra.mxu0 0.0
    %388 = vmatprep.subr.mxu0 0.0
    %389 = vmatpush1.msra.mxu0 0.0
    %390 = vmatprep.subr.mxu0 0.0
    %391 = vmatpush1.msra.mxu0 0.0
    %392 = vmatprep.subr.mxu0 0.0
    %393 = vmatpush1.msra.mxu0 0.0
    %394 = vmatprep.subr.mxu0 0.0
    %395 = vmatpush1.msra.mxu0 0.0
    %396 = vmatprep.subr.mxu0 0.0
    %397 = vmatpush1.msra.mxu0 0.0
    %398 = vmatprep.subr.mxu0 0.0
    %399 = vmatpush1.msra.mxu0 0.0
    %400 = vmatprep.subr.mxu0 0.0
    %401 = vmatpush1.msra.mxu0 0.0
    %402 = vmatprep.subr.mxu0 0.0
    %403 = vmatpush1.msra.mxu0 0.0
    %404 = vmatprep.subr.mxu0 0.0
    %405 = vmatpush1.msra.mxu0 0.0
    %406 = vmatprep.subr.mxu0 0.0
    %407 = vmatpush1.msra.mxu0 0.0
    %408 = vmatprep.subr.mxu0 0.0
    %409 = vmatpush1.msra.mxu0 0.0
    %410 = vmatprep.subr.mxu0 0.0
    %411 = vmatpush1.msra.mxu0 0.0
    %412 = vmatprep.subr.mxu0 0.0
    %413 = vmatpush1.msra.mxu0 0.0
    %414 = vmatprep.subr.mxu0 0.0
    %415 = vmatpush1.msra.mxu0 0.0
    %416 = vmatprep.subr.mxu0 0.0
    %417 = vmatpush1.msra.mxu0 0.0
    %418 = vmatprep.subr.mxu0 0.0
    %419 = vmatpush1.msra.mxu0 0.0
    %420 = vmatprep.subr.mxu0 0.0
    %421 = vmatpush1.msra.mxu0 0.0
    %422 = vmatprep.subr.mxu0 0.0
    %423 = vmatpush1.msra.mxu0 0.0
    %424 = vmatprep.mubr.f32.mxu0 0.0
    %425 = vmatmul.mubr.f32.gmra.mrb[0].mxu0 %v358
    %v426 = vpop.f32.mrb[0].mxu0
    %v427 = vadd.f32 0.0, %v426
    %v428 = vpop.f32.mrb[0].mxu0
    %429 = vdwg.mxu0
    %430 = vmatprep.subr.mxu0 0.0
    %431 = vmatpush1.msra.mxu0 %v349
    %432 = vmatprep.subr.mxu0 0.0
    %433 = vmatpush1.msra.mxu0 %v350
    %434 = vmatprep.subr.mxu0 0.0
    %435 = vmatpush1.msra.mxu0 %v351
    %436 = vmatprep.subr.mxu0 0.0
    %437 = vmatpush1.msra.mxu0 %v352
    %438 = vmatprep.subr.mxu0 0.0
    %439 = vmatpush1.msra.mxu0 0.0
    %440 = vmatprep.subr.mxu0 0.0
    %441 = vmatpush1.msra.mxu0 0.0
    %442 = vmatprep.subr.mxu0 0.0
    %443 = vmatpush1.msra.mxu0 0.0
    %444 = vmatprep.subr.mxu0 0.0
    %445 = vmatpush1.msra.mxu0 0.0
    %446 = vmatprep.subr.mxu0 0.0
    %447 = vmatpush1.msra.mxu0 0.0
    %448 = vmatprep.subr.mxu0 0.0
    %449 = vmatpush1.msra.mxu0 0.0
    %450 = vmatprep.subr.mxu0 0.0
    %451 = vmatpush1.msra.mxu0 0.0
    %452 = vmatprep.subr.mxu0 0.0
    %453 = vmatpush1.msra.mxu0 0.0
    %454 = vmatprep.subr.mxu0 0.0
    %455 = vmatpush1.msra.mxu0 0.0
    %456 = vmatprep.subr.mxu0 0.0
    %457 = vmatpush1.msra.mxu0 0.0
    %458 = vmatprep.subr.mxu0 0.0
    %459 = vmatpush1.msra.mxu0 0.0
    %460 = vmatprep.subr.mxu0 0.0
    %461 = vmatpush1.msra.mxu0 0.0
    %462 = vmatprep.subr.mxu0 0.0
    %463 = vmatpush1.msra.mxu0 0.0
    %464 = vmatprep.subr.mxu0 0.0
    %465 = vmatpush1.msra.mxu0 0.0
    %466 = vmatprep.subr.mxu0 0.0
    %467 = vmatpush1.msra.mxu0 0.0
    %468 = vmatprep.subr.mxu0 0.0
    %469 = vmatpush1.msra.mxu0 0.0
    %470 = vmatprep.subr.mxu0 0.0
    %471 = vmatpush1.msra.mxu0 0.0
    %472 = vmatprep.subr.mxu0 0.0
    %473 = vmatpush1.msra.mxu0 0.0
    %474 = vmatprep.subr.mxu0 0.0
    %475 = vmatpush1.msra.mxu0 0.0
    %476 = vmatprep.subr.mxu0 0.0
    %477 = vmatpush1.msra.mxu0 0.0
    %478 = vmatprep.subr.mxu0 0.0
    %479 = vmatpush1.msra.mxu0 0.0
    %480 = vmatprep.subr.mxu0 0.0
    %481 = vmatpush1.msra.mxu0 0.0
    %482 = vmatprep.subr.mxu0 0.0
    %483 = vmatpush1.msra.mxu0 0.0
    %484 = vmatprep.subr.mxu0 0.0
    %485 = vmatpush1.msra.mxu0 0.0
    %486 = vmatprep.subr.mxu0 0.0
    %487 = vmatpush1.msra.mxu0 0.0
    %488 = vmatprep.subr.mxu0 0.0
    %489 = vmatpush1.msra.mxu0 0.0
    %490 = vmatprep.subr.mxu0 0.0
    %491 = vmatpush1.msra.mxu0 0.0
    %492 = vmatprep.subr.mxu0 0.0
    %493 = vmatpush1.msra.mxu0 0.0
    %494 = vmatprep.mubr.f32.mxu0 0.0
    %495 = vmatmul.mubr.f32.gmra.mrb[0].mxu0 %v148
    %v496 = vpop.f32.mrb[0].mxu0
    %v497 = vadd.f32 %v427, %v496
    %v498 = vpop.f32.mrb[0].mxu0
    %499 = vdwg.mxu0
    %v500 = vld [vmem:[%s8] sm:$0x1]
    %v501 = vadd.f32 %v497, %v500
    %v502 = vxor.u32 %v501, 2147483648
    %v503 = vmul.f32 %v502, 1.442695
    %v504 = vpow.pop %v503
    %v505 = vadd.f32 %v504, 1.0
    %v506 = vrcp.pop %v505
    %v507 = vmul.f32 1.0, %v506
    %v508 = vmax.f32 %v501, 0.0
    %v509 = vld [vmem:[#allocation13] sm:$0xff]
    %v510 = vld [vmem:[#allocation13 + $0x8] sm:$0xff]
    %v511 = vld [vmem:[#allocation13 + $0x10] sm:$0xff]
    %v512 = vld [vmem:[#allocation13 + $0x18] sm:$0xff]
    %v513 = vld [vmem:[%s10] sm:$0x1]
    %515 = vrot.lane.b32.xlu0 %v508, 96
    %v516 = vpop.permute.xlu0 %515
    %v517 = vsel %vm146, %v516, 0
    %519 = vmatprep.subr.mxu0 0.0
    %520 = vmatpush1.msra.mxu0 %v509
    %521 = vmatprep.subr.mxu0 0.0
    %522 = vmatpush1.msra.mxu0 %v510
    %523 = vmatprep.subr.mxu0 0.0
    %524 = vmatpush1.msra.mxu0 %v511
    %525 = vmatprep.subr.mxu0 0.0
    %526 = vmatpush1.msra.mxu0 %v512
    %527 = vmatprep.subr.mxu0 0.0
    %528 = vmatpush1.msra.mxu0 0.0
    %529 = vmatprep.subr.mxu0 0.0
    %530 = vmatpush1.msra.mxu0 0.0
    %531 = vmatprep.subr.mxu0 0.0
    %532 = vmatpush1.msra.mxu0 0.0
    %533 = vmatprep.subr.mxu0 0.0
    %534 = vmatpush1.msra.mxu0 0.0
    %535 = vmatprep.subr.mxu0 0.0
    %536 = vmatpush1.msra.mxu0 0.0
    %537 = vmatprep.subr.mxu0 0.0
    %538 = vmatpush1.msra.mxu0 0.0
    %539 = vmatprep.subr.mxu0 0.0
    %540 = vmatpush1.msra.mxu0 0.0
    %541 = vmatprep.subr.mxu0 0.0
    %542 = vmatpush1.msra.mxu0 0.0
    %543 = vmatprep.subr.mxu0 0.0
    %544 = vmatpush1.msra.mxu0 0.0
    %545 = vmatprep.subr.mxu0 0.0
    %546 = vmatpush1.msra.mxu0 0.0
    %547 = vmatprep.subr.mxu0 0.0
    %548 = vmatpush1.msra.mxu0 0.0
    %549 = vmatprep.subr.mxu0 0.0
    %550 = vmatpush1.msra.mxu0 0.0
    %551 = vmatprep.subr.mxu0 0.0
    %552 = vmatpush1.msra.mxu0 0.0
    %553 = vmatprep.subr.mxu0 0.0
    %554 = vmatpush1.msra.mxu0 0.0
    %555 = vmatprep.subr.mxu0 0.0
    %556 = vmatpush1.msra.mxu0 0.0
    %557 = vmatprep.subr.mxu0 0.0
    %558 = vmatpush1.msra.mxu0 0.0
    %559 = vmatprep.subr.mxu0 0.0
    %560 = vmatpush1.msra.mxu0 0.0
    %561 = vmatprep.subr.mxu0 0.0
    %562 = vmatpush1.msra.mxu0 0.0
    %563 = vmatprep.subr.mxu0 0.0
    %564 = vmatpush1.msra.mxu0 0.0
    %565 = vmatprep.subr.mxu0 0.0
    %566 = vmatpush1.msra.mxu0 0.0
    %567 = vmatprep.subr.mxu0 0.0
    %568 = vmatpush1.msra.mxu0 0.0
    %569 = vmatprep.subr.mxu0 0.0
    %570 = vmatpush1.msra.mxu0 0.0
    %571 = vmatprep.subr.mxu0 0.0
    %572 = vmatpush1.msra.mxu0 0.0
    %573 = vmatprep.subr.mxu0 0.0
    %574 = vmatpush1.msra.mxu0 0.0
    %575 = vmatprep.subr.mxu0 0.0
    %576 = vmatpush1.msra.mxu0 0.0
    %577 = vmatprep.subr.mxu0 0.0
    %578 = vmatpush1.msra.mxu0 0.0
    %579 = vmatprep.subr.mxu0 0.0
    %580 = vmatpush1.msra.mxu0 0.0
    %581 = vmatprep.subr.mxu0 0.0
    %582 = vmatpush1.msra.mxu0 0.0
    %583 = vmatprep.mubr.f32.mxu0 0.0
    %584 = vmatmul.mubr.f32.gmra.mrb[0].mxu0 %v517
    %v585 = vpop.f32.mrb[0].mxu0
    %v586 = vadd.f32 %v513, %v585
    %v587 = vpop.f32.mrb[0].mxu0
    %588 = vdwg.mxu0
    %v589 = vmul.f32 %v507, %v586
    %v590 = vadd.f32 %v132, %v589
    %s591 = scalar_lea.vmem [#allocation8], 32
    %v592 = vld [vmem:[%s591] sm:$0xff]
    %v593 = vld [vmem:[%s591 + $0x8] sm:$0xff]
    %v594 = vld [vmem:[%s591 + $0x10] sm:$0xff]
    %v595 = vld [vmem:[%s591 + $0x18] sm:$0xff]
    %v596 = vld [vmem:[%s3 + $0x1] sm:$0x1]
    %v598 = vsel %vm146, %v590, 0
    %600 = vmatprep.subr.mxu0 0.0
    %601 = vmatpush1.msra.mxu0 %v592
    %602 = vmatprep.subr.mxu0 0.0
    %603 = vmatpush1.msra.mxu0 %v593
    %604 = vmatprep.subr.mxu0 0.0
    %605 = vmatpush1.msra.mxu0 %v594
    %606 = vmatprep.subr.mxu0 0.0
    %607 = vmatpush1.msra.mxu0 %v595
    %608 = vmatprep.subr.mxu0 0.0
    %609 = vmatpush1.msra.mxu0 0.0
    %610 = vmatprep.subr.mxu0 0.0
    %611 = vmatpush1.msra.mxu0 0.0
    %612 = vmatprep.subr.mxu0 0.0
    %613 = vmatpush1.msra.mxu0 0.0
    %614 = vmatprep.subr.mxu0 0.0
    %615 = vmatpush1.msra.mxu0 0.0
    %616 = vmatprep.subr.mxu0 0.0
    %617 = vmatpush1.msra.mxu0 0.0
    %618 = vmatprep.subr.mxu0 0.0
    %619 = vmatpush1.msra.mxu0 0.0
    %620 = vmatprep.subr.mxu0 0.0
    %621 = vmatpush1.msra.mxu0 0.0
    %622 = vmatprep.subr.mxu0 0.0
    %623 = vmatpush1.msra.mxu0 0.0
    %624 = vmatprep.subr.mxu0 0.0
    %625 = vmatpush1.msra.mxu0 0.0
    %626 = vmatprep.subr.mxu0 0.0
    %627 = vmatpush1.msra.mxu0 0.0
    %628 = vmatprep.subr.mxu0 0.0
    %629 = vmatpush1.msra.mxu0 0.0
    %630 = vmatprep.subr.mxu0 0.0
    %631 = vmatpush1.msra.mxu0 0.0
    %632 = vmatprep.subr.mxu0 0.0
    %633 = vmatpush1.msra.mxu0 0.0
    %634 = vmatprep.subr.mxu0 0.0
    %635 = vmatpush1.msra.mxu0 0.0
    %636 = vmatprep.subr.mxu0 0.0
    %637 = vmatpush1.msra.mxu0 0.0
    %638 = vmatprep.subr.mxu0 0.0
    %639 = vmatpush1.msra.mxu0 0.0
    %640 = vmatprep.subr.mxu0 0.0
    %641 = vmatpush1.msra.mxu0 0.0
    %642 = vmatprep.subr.mxu0 0.0
    %643 = vmatpush1.msra.mxu0 0.0
    %644 = vmatprep.subr.mxu0 0.0
    %645 = vmatpush1.msra.mxu0 0.0
    %646 = vmatprep.subr.mxu0 0.0
    %647 = vmatpush1.msra.mxu0 0.0
    %648 = vmatprep.subr.mxu0 0.0
    %649 = vmatpush1.msra.mxu0 0.0
    %650 = vmatprep.subr.mxu0 0.0
    %651 = vmatpush1.msra.mxu0 0.0
    %652 = vmatprep.subr.mxu0 0.0
    %653 = vmatpush1.msra.mxu0 0.0
    %654 = vmatprep.subr.mxu0 0.0
    %655 = vmatpush1.msra.mxu0 0.0
    %656 = vmatprep.subr.mxu0 0.0
    %657 = vmatpush1.msra.mxu0 0.0
    %658 = vmatprep.subr.mxu0 0.0
    %659 = vmatpush1.msra.mxu0 0.0
    %660 = vmatprep.subr.mxu0 0.0
    %661 = vmatpush1.msra.mxu0 0.0
    %662 = vmatprep.subr.mxu0 0.0
    %663 = vmatpush1.msra.mxu0 0.0
    %664 = vmatprep.mubr.f32.mxu0 0.0
    %665 = vmatmul.mubr.f32.gmra.mrb[0].mxu0 %v598
    %v666 = vpop.f32.mrb[0].mxu0
    %v667 = vadd.f32 %v596, %v666
    %v668 = vpop.f32.mrb[0].mxu0
    %669 = vdwg.mxu0
    %v670 = vlaneseq
    %v671 = vshrl.u32 %v670, 7
    %v672 = vsub.s32 0, %v671
    %v673 = vrot.slane %v667, %v672
    %v674 = vadd.f32 %v219, %v673
    %v675 = vmax.f32 %v674, 0.0
    %v676 = vld [vmem:[%s4 + $0x1] sm:$0x1]
    %v677 = vlaneseq
    %v678 = vshrl.u32 %v677, 7
    %v679 = vsub.s32 0, %v678
    %v680 = vrot.slane %v676, %v679
    %v681 = vmul.f32 %v675, %v680
    %682 = vadd.xlane.f32.xlu0 %v681
    %v683 = vpop.xlane.xlu0 %682
    %s684 = sld [smem:[#allocation9 + $0x1]]
    %v685 = vstv %s684
    %v686 = vadd.f32 %v683, %v685
    %v687 = vxor.u32 %v686, 2147483648
    %v688 = vmul.f32 %v687, 1.442695
    %v689 = vpow.pop %v688
    %v690 = vadd.f32 %v689, 1.0
    %v691 = vrcp.pop %v690
    %v692 = vmul.f32 1.0, %v691
    %v693 = vmul.f32 %v692, %v137
    %v694 = vsel %vm320, %v693, 0.0
    %695 = vadd.xlane.f32.xlu0 %v694
    %v696 = vpop.xlane.xlu0 %695
    %v697 = vrot.slane %v696, 4
    %v698 = vadd.f32 %v696, %v697
    %v699 = vrot.slane %v698, 2
    %v700 = vadd.f32 %v698, %v699
    %v701 = vrot.slane %v700, 1
    %v702 = vadd.f32 %v700, %v701
    %s703 = vtos %v702
    %p704 = scmp.gt.f32.partialorder %s703, 0.0
    %v705 = vstv %s703
    %v706 = vrcp.pop %v705
    %s707 = vtos %v706
    %v708 = vstv %s707
    %v709 = vmul.f32 %v693, %v708
    %s710 = scalar_select %p704, 1, 0
    %v711 = vstv %s710
    %vm712 = vcmp.eq.s32.totalorder %v711, 1
    %v713 = vsel %vm712, %v709, %v693
    %v714 = vmul.f32 %v132, %v713
    %v715 = vsel %vm146, %v714, 0.0
    %v716 = vrot.slane %v715, 4
    %v717 = vadd.f32 %v715, %v716
    %v718 = vrot.slane %v717, 2
    %v719 = vadd.f32 %v717, %v718
    %v720 = vrot.slane %v719, 1
    %v721 = vadd.f32 %v719, %v720
    %s722 = scalar_lea.vmem [#allocation10], 32
    %v723 = vld [vmem:[%s722] sm:$0xff]
    %v724 = vld [vmem:[%s722 + $0x8] sm:$0xff]
    %v725 = vld [vmem:[%s722 + $0x10] sm:$0xff]
    %v726 = vld [vmem:[%s722 + $0x18] sm:$0xff]
    %s727 = scalar_lea.vmem [#allocation12], 32
    %v728 = vld [vmem:[%s727] sm:$0xff]
    %v729 = vld [vmem:[%s727 + $0x8] sm:$0xff]
    %v730 = vld [vmem:[%s727 + $0x10] sm:$0xff]
    %v731 = vld [vmem:[%s727 + $0x18] sm:$0xff]
    %v733 = vsel %vm146, %v721, 0
    %735 = vmatprep.subr.mxu0 0.0
    %736 = vmatpush1.msra.mxu0 %v728
    %737 = vmatprep.subr.mxu0 0.0
    %738 = vmatpush1.msra.mxu0 %v729
    %739 = vmatprep.subr.mxu0 0.0
    %740 = vmatpush1.msra.mxu0 %v730
    %741 = vmatprep.subr.mxu0 0.0
    %742 = vmatpush1.msra.mxu0 %v731
    %743 = vmatprep.subr.mxu0 0.0
    %744 = vmatpush1.msra.mxu0 0.0
    %745 = vmatprep.subr.mxu0 0.0
    %746 = vmatpush1.msra.mxu0 0.0
    %747 = vmatprep.subr.mxu0 0.0
    %748 = vmatpush1.msra.mxu0 0.0
    %749 = vmatprep.subr.mxu0 0.0
    %750 = vmatpush1.msra.mxu0 0.0
    %751 = vmatprep.subr.mxu0 0.0
    %752 = vmatpush1.msra.mxu0 0.0
    %753 = vmatprep.subr.mxu0 0.0
    %754 = vmatpush1.msra.mxu0 0.0
    %755 = vmatprep.subr.mxu0 0.0
    %756 = vmatpush1.msra.mxu0 0.0
    %757 = vmatprep.subr.mxu0 0.0
    %758 = vmatpush1.msra.mxu0 0.0
    %759 = vmatprep.subr.mxu0 0.0
    %760 = vmatpush1.msra.mxu0 0.0
    %761 = vmatprep.subr.mxu0 0.0
    %762 = vmatpush1.msra.mxu0 0.0
    %763 = vmatprep.subr.mxu0 0.0
    %764 = vmatpush1.msra.mxu0 0.0
    %765 = vmatprep.subr.mxu0 0.0
    %766 = vmatpush1.msra.mxu0 0.0
    %767 = vmatprep.subr.mxu0 0.0
    %768 = vmatpush1.msra.mxu0 0.0
    %769 = vmatprep.subr.mxu0 0.0
    %770 = vmatpush1.msra.mxu0 0.0
    %771 = vmatprep.subr.mxu0 0.0
    %772 = vmatpush1.msra.mxu0 0.0
    %773 = vmatprep.subr.mxu0 0.0
    %774 = vmatpush1.msra.mxu0 0.0
    %775 = vmatprep.subr.mxu0 0.0
    %776 = vmatpush1.msra.mxu0 0.0
    %777 = vmatprep.subr.mxu0 0.0
    %778 = vmatpush1.msra.mxu0 0.0
    %779 = vmatprep.subr.mxu0 0.0
    %780 = vmatpush1.msra.mxu0 0.0
    %781 = vmatprep.subr.mxu0 0.0
    %782 = vmatpush1.msra.mxu0 0.0
    %783 = vmatprep.subr.mxu0 0.0
    %784 = vmatpush1.msra.mxu0 0.0
    %785 = vmatprep.subr.mxu0 0.0
    %786 = vmatpush1.msra.mxu0 0.0
    %787 = vmatprep.subr.mxu0 0.0
    %788 = vmatpush1.msra.mxu0 0.0
    %789 = vmatprep.subr.mxu0 0.0
    %790 = vmatpush1.msra.mxu0 0.0
    %791 = vmatprep.subr.mxu0 0.0
    %792 = vmatpush1.msra.mxu0 0.0
    %793 = vmatprep.subr.mxu0 0.0
    %794 = vmatpush1.msra.mxu0 0.0
    %795 = vmatprep.subr.mxu0 0.0
    %796 = vmatpush1.msra.mxu0 0.0
    %797 = vmatprep.subr.mxu0 0.0
    %798 = vmatpush1.msra.mxu0 0.0
    %799 = vmatprep.mubr.f32.mxu0 0.0
    %800 = vmatmul.mubr.f32.gmra.mrb[0].mxu0 %v733
    %v801 = vpop.f32.mrb[0].mxu0
    %v802 = vadd.f32 0.0, %v801
    %v803 = vpop.f32.mrb[0].mxu0
    %804 = vdwg.mxu0
    %805 = vmatprep.subr.mxu0 0.0
    %806 = vmatpush1.msra.mxu0 %v723
    %807 = vmatprep.subr.mxu0 0.0
    %808 = vmatpush1.msra.mxu0 %v724
    %809 = vmatprep.subr.mxu0 0.0
    %810 = vmatpush1.msra.mxu0 %v725
    %811 = vmatprep.subr.mxu0 0.0
    %812 = vmatpush1.msra.mxu0 %v726
    %813 = vmatprep.subr.mxu0 0.0
    %814 = vmatpush1.msra.mxu0 0.0
    %815 = vmatprep.subr.mxu0 0.0
    %816 = vmatpush1.msra.mxu0 0.0
    %817 = vmatprep.subr.mxu0 0.0
    %818 = vmatpush1.msra.mxu0 0.0
    %819 = vmatprep.subr.mxu0 0.0
    %820 = vmatpush1.msra.mxu0 0.0
    %821 = vmatprep.subr.mxu0 0.0
    %822 = vmatpush1.msra.mxu0 0.0
    %823 = vmatprep.subr.mxu0 0.0
    %824 = vmatpush1.msra.mxu0 0.0
    %825 = vmatprep.subr.mxu0 0.0
    %826 = vmatpush1.msra.mxu0 0.0
    %827 = vmatprep.subr.mxu0 0.0
    %828 = vmatpush1.msra.mxu0 0.0
    %829 = vmatprep.subr.mxu0 0.0
    %830 = vmatpush1.msra.mxu0 0.0
    %831 = vmatprep.subr.mxu0 0.0
    %832 = vmatpush1.msra.mxu0 0.0
    %833 = vmatprep.subr.mxu0 0.0
    %834 = vmatpush1.msra.mxu0 0.0
    %835 = vmatprep.subr.mxu0 0.0
    %836 = vmatpush1.msra.mxu0 0.0
    %837 = vmatprep.subr.mxu0 0.0
    %838 = vmatpush1.msra.mxu0 0.0
    %839 = vmatprep.subr.mxu0 0.0
    %840 = vmatpush1.msra.mxu0 0.0
    %841 = vmatprep.subr.mxu0 0.0
    %842 = vmatpush1.msra.mxu0 0.0
    %843 = vmatprep.subr.mxu0 0.0
    %844 = vmatpush1.msra.mxu0 0.0
    %845 = vmatprep.subr.mxu0 0.0
    %846 = vmatpush1.msra.mxu0 0.0
    %847 = vmatprep.subr.mxu0 0.0
    %848 = vmatpush1.msra.mxu0 0.0
    %849 = vmatprep.subr.mxu0 0.0
    %850 = vmatpush1.msra.mxu0 0.0
    %851 = vmatprep.subr.mxu0 0.0
    %852 = vmatpush1.msra.mxu0 0.0
    %853 = vmatprep.subr.mxu0 0.0
    %854 = vmatpush1.msra.mxu0 0.0
    %855 = vmatprep.subr.mxu0 0.0
    %856 = vmatpush1.msra.mxu0 0.0
    %857 = vmatprep.subr.mxu0 0.0
    %858 = vmatpush1.msra.mxu0 0.0
    %859 = vmatprep.subr.mxu0 0.0
    %860 = vmatpush1.msra.mxu0 0.0
    %861 = vmatprep.subr.mxu0 0.0
    %862 = vmatpush1.msra.mxu0 0.0
    %863 = vmatprep.subr.mxu0 0.0
    %864 = vmatpush1.msra.mxu0 0.0
    %865 = vmatprep.subr.mxu0 0.0
    %866 = vmatpush1.msra.mxu0 0.0
    %867 = vmatprep.subr.mxu0 0.0
    %868 = vmatpush1.msra.mxu0 0.0
    %869 = vmatprep.mubr.f32.mxu0 0.0
    %870 = vmatmul.mubr.f32.gmra.mrb[0].mxu0 %v598
    %v871 = vpop.f32.mrb[0].mxu0
    %v872 = vadd.f32 %v802, %v871
    %v873 = vpop.f32.mrb[0].mxu0
    %874 = vdwg.mxu0
    %v875 = vld [vmem:[%s8 + $0x1] sm:$0x1]
    %v876 = vadd.f32 %v872, %v875
    %v877 = vxor.u32 %v876, 2147483648
    %v878 = vmul.f32 %v877, 1.442695
    %v879 = vpow.pop %v878
    %v880 = vadd.f32 %v879, 1.0
    %v881 = vrcp.pop %v880
    %v882 = vmul.f32 1.0, %v881
    %v883 = vmax.f32 %v876, 0.0
    %s884 = scalar_lea.vmem [#allocation13], 32
    %v885 = vld [vmem:[%s884] sm:$0xff]
    %v886 = vld [vmem:[%s884 + $0x8] sm:$0xff]
    %v887 = vld [vmem:[%s884 + $0x10] sm:$0xff]
    %v888 = vld [vmem:[%s884 + $0x18] sm:$0xff]
    %v889 = vld [vmem:[%s10 + $0x1] sm:$0x1]
    %891 = vrot.lane.b32.xlu0 %v883, 96
    %v892 = vpop.permute.xlu0 %891
    %v893 = vsel %vm146, %v892, 0
    %895 = vmatprep.subr.mxu0 0.0
    %896 = vmatpush1.msra.mxu0 %v885
    %897 = vmatprep.subr.mxu0 0.0
    %898 = vmatpush1.msra.mxu0 %v886
    %899 = vmatprep.subr.mxu0 0.0
    %900 = vmatpush1.msra.mxu0 %v887
    %901 = vmatprep.subr.mxu0 0.0
    %902 = vmatpush1.msra.mxu0 %v888
    %903 = vmatprep.subr.mxu0 0.0
    %904 = vmatpush1.msra.mxu0 0.0
    %905 = vmatprep.subr.mxu0 0.0
    %906 = vmatpush1.msra.mxu0 0.0
    %907 = vmatprep.subr.mxu0 0.0
    %908 = vmatpush1.msra.mxu0 0.0
    %909 = vmatprep.subr.mxu0 0.0
    %910 = vmatpush1.msra.mxu0 0.0
    %911 = vmatprep.subr.mxu0 0.0
    %912 = vmatpush1.msra.mxu0 0.0
    %913 = vmatprep.subr.mxu0 0.0
    %914 = vmatpush1.msra.mxu0 0.0
    %915 = vmatprep.subr.mxu0 0.0
    %916 = vmatpush1.msra.mxu0 0.0
    %917 = vmatprep.subr.mxu0 0.0
    %918 = vmatpush1.msra.mxu0 0.0
    %919 = vmatprep.subr.mxu0 0.0
    %920 = vmatpush1.msra.mxu0 0.0
    %921 = vmatprep.subr.mxu0 0.0
    %922 = vmatpush1.msra.mxu0 0.0
    %923 = vmatprep.subr.mxu0 0.0
    %924 = vmatpush1.msra.mxu0 0.0
    %925 = vmatprep.subr.mxu0 0.0
    %926 = vmatpush1.msra.mxu0 0.0
    %927 = vmatprep.subr.mxu0 0.0
    %928 = vmatpush1.msra.mxu0 0.0
    %929 = vmatprep.subr.mxu0 0.0
    %930 = vmatpush1.msra.mxu0 0.0
    %931 = vmatprep.subr.mxu0 0.0
    %932 = vmatpush1.msra.mxu0 0.0
    %933 = vmatprep.subr.mxu0 0.0
    %934 = vmatpush1.msra.mxu0 0.0
    %935 = vmatprep.subr.mxu0 0.0
    %936 = vmatpush1.msra.mxu0 0.0
    %937 = vmatprep.subr.mxu0 0.0
    %938 = vmatpush1.msra.mxu0 0.0
    %939 = vmatprep.subr.mxu0 0.0
    %940 = vmatpush1.msra.mxu0 0.0
    %941 = vmatprep.subr.mxu0 0.0
    %942 = vmatpush1.msra.mxu0 0.0
    %943 = vmatprep.subr.mxu0 0.0
    %944 = vmatpush1.msra.mxu0 0.0
    %945 = vmatprep.subr.mxu0 0.0
    %946 = vmatpush1.msra.mxu0 0.0
    %947 = vmatprep.subr.mxu0 0.0
    %948 = vmatpush1.msra.mxu0 0.0
    %949 = vmatprep.subr.mxu0 0.0
    %950 = vmatpush1.msra.mxu0 0.0
    %951 = vmatprep.subr.mxu0 0.0
    %952 = vmatpush1.msra.mxu0 0.0
    %953 = vmatprep.subr.mxu0 0.0
    %954 = vmatpush1.msra.mxu0 0.0
    %955 = vmatprep.subr.mxu0 0.0
    %956 = vmatpush1.msra.mxu0 0.0
    %957 = vmatprep.subr.mxu0 0.0
    %958 = vmatpush1.msra.mxu0 0.0
    %959 = vmatprep.mubr.f32.mxu0 0.0
    %960 = vmatmul.mubr.f32.gmra.mrb[0].mxu0 %v893
    %v961 = vpop.f32.mrb[0].mxu0
    %v962 = vadd.f32 %v889, %v961
    %v963 = vpop.f32.mrb[0].mxu0
    %964 = vdwg.mxu0
    %v965 = vmul.f32 %v882, %v962
    %v966 = vadd.f32 %v590, %v965
    %967 = vst.msk [vmem:[#allocation15] sm:$0xff] %vm146, %v132
    %vm968 = vcmask 253952
    %969 = vst.msk [vmem:[#allocation15] sm:$0x1] %vm968, %v966
    // Predicated region
    $region74: #{tpu_custom_call.1} parent=1 // pred_check
      _
    $region75: #{tpu_custom_call.1} parent=1 // pred_check_branch
      %971 = sbr.rel (0) target = $region77
    $region76: #{tpu_custom_call.1} parent=1 // pred_region
      %s973 = ssub.s32 128, 128
      %974 = vsyncadd [#allocation4], %s973
      %s976 = sshll.u32 [#allocation15], 4
      %s977 = int_to_ptr.vmem [resolvable:$true] %s976
      %979 = dma.vmem_to_hbm [thread:$0]  %s977, 128, %s11, [#allocation4]
    $region77: #{tpu_custom_call.1} parent=1 // pred_fallthru
      _
    // Predicated region
    $region78: #{tpu_custom_call.1} parent=1 // pred_check
      _
    $region79: #{tpu_custom_call.1} parent=1 // pred_check_branch
      %981 = sbr.rel (0) target = $region81
    $region80: #{tpu_custom_call.1} parent=1 // pred_region
      %982 = dma.done [#allocation4], 128
    $region81: #{tpu_custom_call.1} parent=1 // pred_fallthru
      _
    %983 = vsyncpa [#allocation3], 1
    %984 = vsyncpa [#allocation7], 1
    %985 = vsyncpa [#allocation11], 1
    %986 = vsyncpa [#allocation14], 1
    %987 = vsyncpa [#allocation4], 1
    %988 = vsyncpa [#allocation5], 1

</llo_original>
